<compile_context>
chip_gen: v6e
topology: v6e:2x2x1
jax: 0.10.0
libtpu: 0.0.40
codegen_flags: <defaults>
</compile_context>

<pallas_src>
import jax
import jax.numpy as jnp
import numpy as np
from jax.experimental import pallas as pl
from jax.experimental.pallas import tpu as pltpu


def _dma_copy_kernel(p_hbm_ref, o_hbm_ref, sem):
    # Forward pass of GridNet: materialize the parameter tensor unchanged.
    # One whole-array HBM->HBM DMA; no VMEM round trip, no grid steps.
    cp = pltpu.make_async_copy(p_hbm_ref, o_hbm_ref, sem)
    cp.start()
    cp.wait()


def gridnet_forward(params):
    """Pallas implementation of GridNet.forward().

    params: jnp.ndarray of shape (1, 3, gx, gy, gz).
    returns: jnp.ndarray of identical shape/dtype/values.
    """
    return pl.pallas_call(
        _dma_copy_kernel,
        out_shape=jax.ShapeDtypeStruct(params.shape, params.dtype),
        in_specs=[pl.BlockSpec(memory_space=pl.ANY)],
        out_specs=pl.BlockSpec(memory_space=pl.ANY),
        scratch_shapes=[pltpu.SemaphoreType.DMA(())],
    )(params)


class GridNetPallas:
    """Mirror of the PyTorch GridNet module (parameter init + forward)."""

    def __init__(self, grid_x, grid_y, grid_z, key):
        # nn.Parameter(0.1 * torch.randn(1, 3, grid_x, grid_y, grid_z))
        self.params = 0.1 * jax.random.normal(
            key, (1, 3, grid_x, grid_y, grid_z), dtype=jnp.float32
        )
        self._forward = jax.jit(gridnet_forward)

    def __call__(self):
        return self._forward(self.params)


if __name__ == "__main__":
    key = jax.random.PRNGKey(0)
    grid_x, grid_y, grid_z = 4, 8, 16

    model = GridNetPallas(grid_x, grid_y, grid_z, key)

    # Host snapshot of the expected values.
    expected = jax.device_get(model.params)

    out = model()
    out = jax.block_until_ready(out)

    # Correctness check against the (trivial) reference: forward() == params.
    assert out.shape == (1, 3, grid_x, grid_y, grid_z)
    assert out.dtype == jnp.float32
    assert np.array_equal(np.asarray(out), expected)

    print("KERNEL_OK")
</pallas_src>

<mosaic_0001>
module attributes {stable_mosaic.version = 11 : i64} {
  func.func @_dma_copy_kernel(%arg0: memref<1x3x4x8x16xf32, #tpu.memory_space<any>>, %arg1: memref<1x3x4x8x16xf32, #tpu.memory_space<any>>, %arg2: memref<!tpu.dma_semaphore, #tpu.memory_space<semaphore_mem>>) attributes {dimension_semantics = [], scalar_prefetch = 0 : i64, scratch_operands = 1 : i64, tpu.core_type = #tpu.core_type<tc>} {
    tpu.enqueue_dma source(%arg0 : memref<1x3x4x8x16xf32, #tpu.memory_space<any>>) target(%arg1 : memref<1x3x4x8x16xf32, #tpu.memory_space<any>>) target_semaphore(%arg2 : memref<!tpu.dma_semaphore, #tpu.memory_space<semaphore_mem>>)
    tpu.wait_dma2 semaphore(%arg2 : memref<!tpu.dma_semaphore, #tpu.memory_space<semaphore_mem>>) src(%arg0 : memref<1x3x4x8x16xf32, #tpu.memory_space<any>>) dst(%arg1 : memref<1x3x4x8x16xf32, #tpu.memory_space<any>>)
    return
  }
}

</mosaic_0001>

<llo_original>
// kernel: gridnet_forward.1
$region0: #{gridnet_forward.1}
  #allocation0 [shape = 'u32[]', space=smem, size = 0x4, offset = 0x4, fixed_abs, tag = 'smem constant byte address 0x4 - core index']
  #allocation1 [shape = 'u32[144,128]{1,0:T(1,128)}', space=vmem, size = 0x12000, scoped, tag = 'internal scratch']
  #allocation2 [shape = 's32[1]{0}', space=sflag, size = 0x4, scoped, tag = 'scratch operand']
  #allocation3 [shape = 's32[]', space=sflag, size = 0x4, offset = 0, fixed_abs, tag = 'sflag constant byte address 0x0 - dummy sync flag']
  #allocation4 [shape = 'u32[0]{0}', space=smem, size = 0, offset = 0, fixed_abs, tag = 'smem constant byte address 0x0 - null']
  %s0 = inlined_call_operand.hbm [shape: f32[1,3,4,8,16], index: 0, kind: input, shape index: {}]
  %s1 = inlined_call_operand.hbm [shape: f32[1,3,4,8,16], index: 1, kind: output, shape index: {}]
  %s2 = sld [smem:[#allocation0]]
  $region2: #{gridnet_forward.1} parent=0
    _
  %s4 = ssub.s32 1, %s2
  %s5 = scalar_select 0, %s4, %s2
  %s7 = sshll.u32 1, 14
  %s8 = sxor.u32 4294967295, %s7
  %12 = dma.general %s0, 1536, %s1, [#allocation2], 131072, [#allocation4], 0, 0
  %s13 = smul.u32 1, 3
  %s14 = smul.u32 %s13, 4
  %s15 = smul.u32 %s14, 8
  %s16 = smul.u32 %s15, 1
  %s17 = sshll.u32 %s16, 4
  %18 = dma.done [#allocation2], %s17
  %19 = vsyncmov [#allocation2]
  %s20 = vpop.sfrf %19
  %p21 = scmp.eq.s32.totalorder %s20, 0
  %p22 = pneg %p21
  %24 = shalt.err (%p22)

</llo_original>
